<compile_context>
chip_gen: v7x
topology: tpu7x:2x2x1
jax: 0.10.0
libtpu: 0.0.40
codegen_flags: <defaults>
</compile_context>

<pallas_src>
import functools

import jax
import jax.numpy as jnp
from jax import lax
from jax.experimental import pallas as pl
from jax.experimental.pallas import tpu as pltpu


def _round_up(v, m):
    return (v + m - 1) // m * m


def _vmem_need_bytes(bblk, n_seq, cpad, opad, o_dim, ksize, itemsize):
    """Rough per-step VMEM footprint: double-buffered blocks + slab scratch."""
    x_blk = bblk * cpad * n_seq * itemsize
    o_blk = bblk * o_dim * n_seq * itemsize
    w_blk = opad * ksize * cpad * itemsize
    b_blk = opad * itemsize
    slab = ksize * cpad * bblk * n_seq * itemsize
    return 2 * (x_blk + o_blk + w_blk + b_blk) + slab


def _choose_batch_block(batch, n_seq, cpad, opad, o_dim, ksize, itemsize,
                        vmem_budget):
    """Largest batch block that (a) divides B, (b) leaves >= 2 grid steps when
    B >= 2 (so both v7x TensorCores get work), and (c) keeps the slab lane
    width and per-step VMEM bounded."""
    best = 1
    for bblk in range(1, batch + 1):
        if batch % bblk:
            continue
        steps = batch // bblk
        if batch >= 2 and steps < 2:
            continue
        if bblk * n_seq > 8192:
            continue
        if _vmem_need_bytes(bblk, n_seq, cpad, opad, o_dim, ksize,
                            itemsize) > vmem_budget:
            continue
        best = bblk
    return best


def _dilated_circ_conv_kernel(x_ref, w_ref, b_ref, o_ref, slab_ref, *,
                              ksize, dilation, pad, n_seq, bblk, o_dim):
    # x_ref:    (Bblk, Cpad, N)     batch block, channel-padded rows
    # w_ref:    (Opad, K*Cpad)      weight, (o, k*Cpad + c) = w[o, c, k]
    # b_ref:    (Opad, 1)           bias (zero-padded rows)
    # o_ref:    (Bblk, O, N)        output block
    # slab_ref: (K*Cpad, Bblk*N)    im2col slab for the fused MXU matmul
    cpad = x_ref.shape[1]
    n = n_seq

    # Build the im2col slab.  Circular padding == circular rotation of the
    # row, so each tap is two static slices of x written straight into a
    # sublane-aligned slab row block (no padded copy is ever materialized):
    #   rolled[:, j] = x[:, (j - shift) mod N],  shift = (pad - k*dil) mod N.
    for b in range(bblk):            # static, fully unrolled
        col0 = b * n
        for k in range(ksize):       # static, fully unrolled
            r0 = k * cpad            # sublane-aligned (cpad % 8 == 0)
            shift = (pad - k * dilation) % n
            if shift == 0:
                slab_ref[r0:r0 + cpad, col0:col0 + n] = x_ref[b, :, :]
            else:
                slab_ref[r0:r0 + cpad, col0:col0 + shift] = (
                    x_ref[b, :, n - shift:n])
                slab_ref[r0:r0 + cpad, col0 + shift:col0 + n] = (
                    x_ref[b, :, 0:n - shift])

    # One fused MXU matmul over the C*K contraction for the whole batch block,
    # f32 accumulate.  Default Mosaic f32 matmul precision is kept on purpose:
    # it matches the lax.Precision.HIGHEST f32 reference within 5e-5 at these
    # contraction lengths (verified by the checks in __main__).
    acc = jnp.dot(w_ref[...], slab_ref[...],
                  preferred_element_type=jnp.float32)
    acc = acc + b_ref[...]

    # Epilogue: per batch element, store the first O rows of its column slice.
    for b in range(bblk):
        o_ref[b, :, :] = acc[:o_dim, b * n:(b + 1) * n].astype(o_ref.dtype)


def dilated_circ_conv(x, weight, bias, *, n_adj, dilation):
    """x: (B, C, N), weight: (O, C, K), bias: (O,).  Returns (B, O, N)."""
    B, C, N = x.shape
    O, Cw, K = weight.shape
    assert Cw == C and K == 2 * n_adj + 1
    pad = n_adj * dilation
    # Same implicit limit as the torch code's x[..., -pad:] slicing.
    assert pad <= N, "circular halo (n_adj*dilation) wider than sequence not supported"

    itemsize = jnp.dtype(x.dtype).itemsize
    cpad = _round_up(C, 8)   # sublane-align channels
    opad = _round_up(O, 8)   # sublane-align output rows of the matmul

    vmem_budget = 32 * 1024 * 1024   # conservative: v7x has 64 MiB physical
    bblk = _choose_batch_block(B, N, cpad, opad, O, K, itemsize, vmem_budget)
    steps = B // bblk
    vmem_need = _vmem_need_bytes(bblk, N, cpad, opad, O, K, itemsize)
    # TODO(synk): add a halo-tiled (C, n_tile + 2*pad) fallback for sequences
    # too long to keep a whole row in VMEM (never hit at snake contour sizes).
    assert vmem_need <= 40 * 1024 * 1024, "sequence too long for whole-row tiles"
    vmem_limit = int(min(max(32 * 1024 * 1024, 2 * vmem_need),
                         48 * 1024 * 1024))

    # Host-side packing (all tiny):
    #   x:  zero-pad channels to a sublane multiple so every slab store in the
    #       kernel is sublane-aligned (padded channels meet zero weights, so
    #       results are bit-identical).
    #   w:  (O, C, K) -> (O, K, C) -> zero-pad C and O -> (Opad, K*Cpad), so
    #       the kernel never slices the lane-resident K axis and the
    #       contraction is K*Cpad wide:  w2[o, k*Cpad + c] = w[o, c, k].
    x_p = x if cpad == C else jnp.pad(x, ((0, 0), (0, cpad - C), (0, 0)))
    w2 = jnp.transpose(weight, (0, 2, 1))                      # (O, K, C)
    if cpad != C:
        w2 = jnp.pad(w2, ((0, 0), (0, 0), (0, cpad - C)))
    if opad != O:
        w2 = jnp.pad(w2, ((0, opad - O), (0, 0), (0, 0)))
    w2 = w2.reshape(opad, K * cpad)
    b2 = bias if opad == O else jnp.pad(bias, ((0, opad - O),))
    b2 = b2.reshape(opad, 1)

    kernel = functools.partial(
        _dilated_circ_conv_kernel,
        ksize=K, dilation=dilation, pad=pad, n_seq=N, bblk=bblk, o_dim=O,
    )

    out = pl.pallas_call(
        kernel,
        out_shape=jax.ShapeDtypeStruct((B, O, N), x.dtype),
        grid_spec=pltpu.PrefetchScalarGridSpec(
            num_scalar_prefetch=0,
            grid=(steps,),
            in_specs=[
                pl.BlockSpec((bblk, cpad, N), lambda i: (i, 0, 0)),
                pl.BlockSpec((opad, K * cpad), lambda i: (0, 0)),
                pl.BlockSpec((opad, 1), lambda i: (0, 0)),
            ],
            out_specs=pl.BlockSpec((bblk, O, N), lambda i: (i, 0, 0)),
            scratch_shapes=[
                pltpu.VMEM((K * cpad, bblk * N), x.dtype),   # im2col slab
            ],
        ),
        compiler_params=pltpu.CompilerParams(
            # Independent batch blocks: shard across the 2 TCs on v7x;
            # perf-neutral on single-TC v5e/v6e.
            dimension_semantics=("parallel",),
            vmem_limit_bytes=vmem_limit,
        ),
    )(x_p, w2, b2)
    return out


def reference_dilated_circ_conv(x, weight, bias, *, n_adj, dilation):
    """Pure-JAX reference mirroring the PyTorch forward."""
    if n_adj != 0:
        pad = n_adj * dilation
        x = jnp.concatenate([x[..., -pad:], x, x[..., :pad]], axis=2)
    out = lax.conv_general_dilated(
        x, weight,
        window_strides=(1,),
        padding="VALID",
        rhs_dilation=(dilation,),
        dimension_numbers=("NCH", "OIH", "NCH"),
        precision=lax.Precision.HIGHEST,
    )
    return out + bias.reshape(1, -1, 1)


if __name__ == "__main__":
    def run_case(key, *, B, C, N, O, n_adj, dilation):
        K = 2 * n_adj + 1
        kx, kw, kb = jax.random.split(key, 3)
        x = jax.random.normal(kx, (B, C, N), dtype=jnp.float32)
        fan_in = C * K
        bound = 1.0 / float(fan_in) ** 0.5
        weight = jax.random.uniform(kw, (O, C, K), jnp.float32, -bound, bound)
        bias = jax.random.uniform(kb, (O,), jnp.float32, -bound, bound)

        out = dilated_circ_conv(x, weight, bias, n_adj=n_adj, dilation=dilation)
        out = jax.block_until_ready(out)

        ref = reference_dilated_circ_conv(x, weight, bias, n_adj=n_adj, dilation=dilation)
        assert out.shape == (B, O, N)
        err = float(jnp.max(jnp.abs(out - ref)))
        assert jnp.allclose(out, ref, atol=5e-5, rtol=5e-5), (
            f"mismatch vs reference (max abs err {err})"
        )

    key = jax.random.PRNGKey(0)
    k1, k2, k3, k4 = jax.random.split(key, 4)
    # Module-default small shape (state_dim=4 channels, 16 contour points).
    run_case(k1, B=2, C=4, N=16, O=4, n_adj=4, dilation=1)
    # Dilation > 1, different in/out channel counts.
    run_case(k2, B=2, C=6, N=40, O=8, n_adj=2, dilation=2)
    # Longer sequence: whole-row lane-dense tile.
    run_case(k3, B=2, C=4, N=1024, O=8, n_adj=4, dilation=1)
    # Larger batch: exercises batch folding (several elements per grid step).
    run_case(k4, B=8, C=4, N=16, O=4, n_adj=4, dilation=1)

    print("KERNEL_OK")
</pallas_src>

<mosaic_0001>
module attributes {stable_mosaic.version = 11 : i64} {
  func.func @_dilated_circ_conv_kernel(%arg0: i32, %arg1: memref<1x8x16xf32, #tpu.memory_space<vmem>>, %arg2: memref<8x72xf32, #tpu.memory_space<vmem>>, %arg3: memref<8x1xf32, #tpu.memory_space<vmem>>, %arg4: memref<1x4x16xf32, #tpu.memory_space<vmem>>, %arg5: memref<72x16xf32, #tpu.memory_space<vmem>>) attributes {dimension_semantics = [#tpu.dimension_semantics<parallel>], iteration_bounds = array<i64: 2>, scalar_prefetch = 0 : i64, scratch_operands = 1 : i64, tpu.core_type = #tpu.core_type<tc>, window_params = [{transform_indices = @transform_0, window_bounds = array<i64: 1, 8, 16>}, {pipeline_mode = #tpu.pipeline_mode<synchronous>, transform_indices = @transform_1, window_bounds = array<i64: 8, 72>}, {pipeline_mode = #tpu.pipeline_mode<synchronous>, transform_indices = @transform_2, window_bounds = array<i64: 8, 1>}, {transform_indices = @transform_3, window_bounds = array<i64: 1, 4, 16>}]} {
    %c0 = arith.constant 0 : index
    %c0_0 = arith.constant 0 : index
    %c12 = arith.constant 12 : index
    %0 = vector.load %arg1[%c0, %c0_0, %c12] : memref<1x8x16xf32, #tpu.memory_space<vmem>>, vector<1x8x4xf32>
    %1 = vector.shape_cast %0 : vector<1x8x4xf32> to vector<8x4xf32>
    %c0_1 = arith.constant 0 : index
    %c0_2 = arith.constant 0 : index
    %2 = vector.load %arg5[%c0_1, %c0_2] : memref<72x16xf32, #tpu.memory_space<vmem>>, vector<8x4xf32>
    tpu.vector_store %arg5[%c0_1, %c0_2], %1 {strides = array<i32>} : memref<72x16xf32, #tpu.memory_space<vmem>>, vector<8x4xf32>,
    %c0_3 = arith.constant 0 : index
    %c0_4 = arith.constant 0 : index
    %c0_5 = arith.constant 0 : index
    %3 = vector.load %arg1[%c0_3, %c0_4, %c0_5] : memref<1x8x16xf32, #tpu.memory_space<vmem>>, vector<1x8x12xf32>
    %4 = vector.shape_cast %3 : vector<1x8x12xf32> to vector<8x12xf32>
    %c0_6 = arith.constant 0 : index
    %c4 = arith.constant 4 : index
    %5 = vector.load %arg5[%c0_6, %c4] : memref<72x16xf32, #tpu.memory_space<vmem>>, vector<8x12xf32>
    tpu.vector_store %arg5[%c0_6, %c4], %4 {strides = array<i32>} : memref<72x16xf32, #tpu.memory_space<vmem>>, vector<8x12xf32>,
    %c0_7 = arith.constant 0 : index
    %c0_8 = arith.constant 0 : index
    %c13 = arith.constant 13 : index
    %6 = vector.load %arg1[%c0_7, %c0_8, %c13] : memref<1x8x16xf32, #tpu.memory_space<vmem>>, vector<1x8x3xf32>
    %7 = vector.shape_cast %6 : vector<1x8x3xf32> to vector<8x3xf32>
    %c8 = arith.constant 8 : index
    %c0_9 = arith.constant 0 : index
    %8 = vector.load %arg5[%c8, %c0_9] : memref<72x16xf32, #tpu.memory_space<vmem>>, vector<8x3xf32>
    tpu.vector_store %arg5[%c8, %c0_9], %7 {strides = array<i32>} : memref<72x16xf32, #tpu.memory_space<vmem>>, vector<8x3xf32>,
    %c0_10 = arith.constant 0 : index
    %c0_11 = arith.constant 0 : index
    %c0_12 = arith.constant 0 : index
    %9 = vector.load %arg1[%c0_10, %c0_11, %c0_12] : memref<1x8x16xf32, #tpu.memory_space<vmem>>, vector<1x8x13xf32>
    %10 = vector.shape_cast %9 : vector<1x8x13xf32> to vector<8x13xf32>
    %c8_13 = arith.constant 8 : index
    %c3 = arith.constant 3 : index
    %11 = vector.load %arg5[%c8_13, %c3] : memref<72x16xf32, #tpu.memory_space<vmem>>, vector<8x13xf32>
    tpu.vector_store %arg5[%c8_13, %c3], %10 {strides = array<i32>} : memref<72x16xf32, #tpu.memory_space<vmem>>, vector<8x13xf32>,
    %c0_14 = arith.constant 0 : index
    %c0_15 = arith.constant 0 : index
    %c14 = arith.constant 14 : index
    %12 = vector.load %arg1[%c0_14, %c0_15, %c14] : memref<1x8x16xf32, #tpu.memory_space<vmem>>, vector<1x8x2xf32>
    %13 = vector.shape_cast %12 : vector<1x8x2xf32> to vector<8x2xf32>
    %c16 = arith.constant 16 : index
    %c0_16 = arith.constant 0 : index
    %14 = vector.load %arg5[%c16, %c0_16] : memref<72x16xf32, #tpu.memory_space<vmem>>, vector<8x2xf32>
    tpu.vector_store %arg5[%c16, %c0_16], %13 {strides = array<i32>} : memref<72x16xf32, #tpu.memory_space<vmem>>, vector<8x2xf32>,
    %c0_17 = arith.constant 0 : index
    %c0_18 = arith.constant 0 : index
    %c0_19 = arith.constant 0 : index
    %15 = vector.load %arg1[%c0_17, %c0_18, %c0_19] : memref<1x8x16xf32, #tpu.memory_space<vmem>>, vector<1x8x14xf32>
    %16 = vector.shape_cast %15 : vector<1x8x14xf32> to vector<8x14xf32>
    %c16_20 = arith.constant 16 : index
    %c2 = arith.constant 2 : index
    %17 = vector.load %arg5[%c16_20, %c2] : memref<72x16xf32, #tpu.memory_space<vmem>>, vector<8x14xf32>
    tpu.vector_store %arg5[%c16_20, %c2], %16 {strides = array<i32>} : memref<72x16xf32, #tpu.memory_space<vmem>>, vector<8x14xf32>,
    %c0_21 = arith.constant 0 : index
    %c0_22 = arith.constant 0 : index
    %c15 = arith.constant 15 : index
    %18 = vector.load %arg1[%c0_21, %c0_22, %c15] : memref<1x8x16xf32, #tpu.memory_space<vmem>>, vector<1x8x1xf32>
    %19 = vector.shape_cast %18 : vector<1x8x1xf32> to vector<8x1xf32>
    %c24 = arith.constant 24 : index
    %c0_23 = arith.constant 0 : index
    %20 = vector.load %arg5[%c24, %c0_23] : memref<72x16xf32, #tpu.memory_space<vmem>>, vector<8x1xf32>
    tpu.vector_store %arg5[%c24, %c0_23], %19 {strides = array<i32>} : memref<72x16xf32, #tpu.memory_space<vmem>>, vector<8x1xf32>,
    %c0_24 = arith.constant 0 : index
    %c0_25 = arith.constant 0 : index
    %c0_26 = arith.constant 0 : index
    %21 = vector.load %arg1[%c0_24, %c0_25, %c0_26] : memref<1x8x16xf32, #tpu.memory_space<vmem>>, vector<1x8x15xf32>
    %22 = vector.shape_cast %21 : vector<1x8x15xf32> to vector<8x15xf32>
    %c24_27 = arith.constant 24 : index
    %c1 = arith.constant 1 : index
    %23 = vector.load %arg5[%c24_27, %c1] : memref<72x16xf32, #tpu.memory_space<vmem>>, vector<8x15xf32>
    tpu.vector_store %arg5[%c24_27, %c1], %22 {strides = array<i32>} : memref<72x16xf32, #tpu.memory_space<vmem>>, vector<8x15xf32>,
    %c0_28 = arith.constant 0 : index
    %c0_29 = arith.constant 0 : index
    %c0_30 = arith.constant 0 : index
    %24 = vector.load %arg1[%c0_28, %c0_29, %c0_30] : memref<1x8x16xf32, #tpu.memory_space<vmem>>, vector<1x8x16xf32>
    %25 = vector.shape_cast %24 : vector<1x8x16xf32> to vector<8x16xf32>
    %c32 = arith.constant 32 : index
    %c0_31 = arith.constant 0 : index
    %26 = vector.load %arg5[%c32, %c0_31] : memref<72x16xf32, #tpu.memory_space<vmem>>, vector<8x16xf32>
    tpu.vector_store %arg5[%c32, %c0_31], %25 {strides = array<i32>} : memref<72x16xf32, #tpu.memory_space<vmem>>, vector<8x16xf32>,
    %c0_32 = arith.constant 0 : index
    %c0_33 = arith.constant 0 : index
    %c1_34 = arith.constant 1 : index
    %27 = vector.load %arg1[%c0_32, %c0_33, %c1_34] : memref<1x8x16xf32, #tpu.memory_space<vmem>>, vector<1x8x15xf32>
    %28 = vector.shape_cast %27 : vector<1x8x15xf32> to vector<8x15xf32>
    %c40 = arith.constant 40 : index
    %c0_35 = arith.constant 0 : index
    %29 = vector.load %arg5[%c40, %c0_35] : memref<72x16xf32, #tpu.memory_space<vmem>>, vector<8x15xf32>
    tpu.vector_store %arg5[%c40, %c0_35], %28 {strides = array<i32>} : memref<72x16xf32, #tpu.memory_space<vmem>>, vector<8x15xf32>,
    %c0_36 = arith.constant 0 : index
    %c0_37 = arith.constant 0 : index
    %c0_38 = arith.constant 0 : index
    %30 = vector.load %arg1[%c0_36, %c0_37, %c0_38] : memref<1x8x16xf32, #tpu.memory_space<vmem>>, vector<1x8x1xf32>
    %31 = vector.shape_cast %30 : vector<1x8x1xf32> to vector<8x1xf32>
    %c40_39 = arith.constant 40 : index
    %c15_40 = arith.constant 15 : index
    %32 = vector.load %arg5[%c40_39, %c15_40] : memref<72x16xf32, #tpu.memory_space<vmem>>, vector<8x1xf32>
    tpu.vector_store %arg5[%c40_39, %c15_40], %31 {strides = array<i32>} : memref<72x16xf32, #tpu.memory_space<vmem>>, vector<8x1xf32>,
    %c0_41 = arith.constant 0 : index
    %c0_42 = arith.constant 0 : index
    %c2_43 = arith.constant 2 : index
    %33 = vector.load %arg1[%c0_41, %c0_42, %c2_43] : memref<1x8x16xf32, #tpu.memory_space<vmem>>, vector<1x8x14xf32>
    %34 = vector.shape_cast %33 : vector<1x8x14xf32> to vector<8x14xf32>
    %c48 = arith.constant 48 : index
    %c0_44 = arith.constant 0 : index
    %35 = vector.load %arg5[%c48, %c0_44] : memref<72x16xf32, #tpu.memory_space<vmem>>, vector<8x14xf32>
    tpu.vector_store %arg5[%c48, %c0_44], %34 {strides = array<i32>} : memref<72x16xf32, #tpu.memory_space<vmem>>, vector<8x14xf32>,
    %c0_45 = arith.constant 0 : index
    %c0_46 = arith.constant 0 : index
    %c0_47 = arith.constant 0 : index
    %36 = vector.load %arg1[%c0_45, %c0_46, %c0_47] : memref<1x8x16xf32, #tpu.memory_space<vmem>>, vector<1x8x2xf32>
    %37 = vector.shape_cast %36 : vector<1x8x2xf32> to vector<8x2xf32>
    %c48_48 = arith.constant 48 : index
    %c14_49 = arith.constant 14 : index
    %38 = vector.load %arg5[%c48_48, %c14_49] : memref<72x16xf32, #tpu.memory_space<vmem>>, vector<8x2xf32>
    tpu.vector_store %arg5[%c48_48, %c14_49], %37 {strides = array<i32>} : memref<72x16xf32, #tpu.memory_space<vmem>>, vector<8x2xf32>,
    %c0_50 = arith.constant 0 : index
    %c0_51 = arith.constant 0 : index
    %c3_52 = arith.constant 3 : index
    %39 = vector.load %arg1[%c0_50, %c0_51, %c3_52] : memref<1x8x16xf32, #tpu.memory_space<vmem>>, vector<1x8x13xf32>
    %40 = vector.shape_cast %39 : vector<1x8x13xf32> to vector<8x13xf32>
    %c56 = arith.constant 56 : index
    %c0_53 = arith.constant 0 : index
    %41 = vector.load %arg5[%c56, %c0_53] : memref<72x16xf32, #tpu.memory_space<vmem>>, vector<8x13xf32>
    tpu.vector_store %arg5[%c56, %c0_53], %40 {strides = array<i32>} : memref<72x16xf32, #tpu.memory_space<vmem>>, vector<8x13xf32>,
    %c0_54 = arith.constant 0 : index
    %c0_55 = arith.constant 0 : index
    %c0_56 = arith.constant 0 : index
    %42 = vector.load %arg1[%c0_54, %c0_55, %c0_56] : memref<1x8x16xf32, #tpu.memory_space<vmem>>, vector<1x8x3xf32>
    %43 = vector.shape_cast %42 : vector<1x8x3xf32> to vector<8x3xf32>
    %c56_57 = arith.constant 56 : index
    %c13_58 = arith.constant 13 : index
    %44 = vector.load %arg5[%c56_57, %c13_58] : memref<72x16xf32, #tpu.memory_space<vmem>>, vector<8x3xf32>
    tpu.vector_store %arg5[%c56_57, %c13_58], %43 {strides = array<i32>} : memref<72x16xf32, #tpu.memory_space<vmem>>, vector<8x3xf32>,
    %c0_59 = arith.constant 0 : index
    %c0_60 = arith.constant 0 : index
    %c4_61 = arith.constant 4 : index
    %45 = vector.load %arg1[%c0_59, %c0_60, %c4_61] : memref<1x8x16xf32, #tpu.memory_space<vmem>>, vector<1x8x12xf32>
    %46 = vector.shape_cast %45 : vector<1x8x12xf32> to vector<8x12xf32>
    %c64 = arith.constant 64 : index
    %c0_62 = arith.constant 0 : index
    %47 = vector.load %arg5[%c64, %c0_62] : memref<72x16xf32, #tpu.memory_space<vmem>>, vector<8x12xf32>
    tpu.vector_store %arg5[%c64, %c0_62], %46 {strides = array<i32>} : memref<72x16xf32, #tpu.memory_space<vmem>>, vector<8x12xf32>,
    %c0_63 = arith.constant 0 : index
    %c0_64 = arith.constant 0 : index
    %c0_65 = arith.constant 0 : index
    %48 = vector.load %arg1[%c0_63, %c0_64, %c0_65] : memref<1x8x16xf32, #tpu.memory_space<vmem>>, vector<1x8x4xf32>
    %49 = vector.shape_cast %48 : vector<1x8x4xf32> to vector<8x4xf32>
    %c64_66 = arith.constant 64 : index
    %c12_67 = arith.constant 12 : index
    %50 = vector.load %arg5[%c64_66, %c12_67] : memref<72x16xf32, #tpu.memory_space<vmem>>, vector<8x4xf32>
    tpu.vector_store %arg5[%c64_66, %c12_67], %49 {strides = array<i32>} : memref<72x16xf32, #tpu.memory_space<vmem>>, vector<8x4xf32>,
    %c0_68 = arith.constant 0 : index
    %c0_69 = arith.constant 0 : index
    %51 = vector.load %arg2[%c0_68, %c0_69] : memref<8x72xf32, #tpu.memory_space<vmem>>, vector<8x72xf32>
    %c0_70 = arith.constant 0 : index
    %c0_71 = arith.constant 0 : index
    %52 = vector.load %arg5[%c0_70, %c0_71] : memref<72x16xf32, #tpu.memory_space<vmem>>, vector<72x16xf32>
    %cst = arith.constant dense<0.000000e+00> : vector<8x16xf32>
    %53 = tpu.matmul %51, %52, %cst {dimension_numbers = #tpu.dot_dimension_numbers<[1], [0], [0], [1], [0, 0, 1, 1], [], []>} : vector<8x72xf32>, vector<72x16xf32>, vector<8x16xf32> -> vector<8x16xf32>
    %c0_72 = arith.constant 0 : index
    %c0_73 = arith.constant 0 : index
    %54 = vector.load %arg3[%c0_72, %c0_73] : memref<8x1xf32, #tpu.memory_space<vmem>>, vector<8x1xf32>
    %55 = vector.broadcast %54 : vector<8x1xf32> to vector<8x16xf32>
    %56 = arith.addf %53, %55 : vector<8x16xf32>
    %57 = vector.extract_strided_slice %56 {offsets = [0, 0], sizes = [4, 16], strides = [1, 1]} : vector<8x16xf32> to vector<4x16xf32>
    %c0_74 = arith.constant 0 : index
    %c0_75 = arith.constant 0 : index
    %c0_76 = arith.constant 0 : index
    %58 = vector.load %arg4[%c0_74, %c0_75, %c0_76] : memref<1x4x16xf32, #tpu.memory_space<vmem>>, vector<1x4x16xf32>
    %59 = vector.shape_cast %58 : vector<1x4x16xf32> to vector<4x16xf32>
    %60 = vector.shape_cast %57 : vector<4x16xf32> to vector<1x4x16xf32>
    tpu.vector_store %arg4[%c0_74, %c0_75, %c0_76], %60 {strides = array<i32>} : memref<1x4x16xf32, #tpu.memory_space<vmem>>, vector<1x4x16xf32>,
    return
  }
  func.func @transform_0(%arg0: i32) -> (i32, i32, i32) {
    %c0_i32 = arith.constant 0 : i32
    %c0_i32_0 = arith.constant 0 : i32
    %c0_i32_1 = arith.constant 0 : i32
    return %arg0, %c0_i32, %c0_i32_0 : i32, i32, i32
  }
  func.func @transform_1(%arg0: i32) -> (i32, i32) {
    %c0_i32 = arith.constant 0 : i32
    %c0_i32_0 = arith.constant 0 : i32
    %c0_i32_1 = arith.constant 0 : i32
    return %c0_i32, %c0_i32_0 : i32, i32
  }
  func.func @transform_2(%arg0: i32) -> (i32, i32) {
    %c0_i32 = arith.constant 0 : i32
    %c0_i32_0 = arith.constant 0 : i32
    %c0_i32_1 = arith.constant 0 : i32
    return %c0_i32, %c0_i32_0 : i32, i32
  }
  func.func @transform_3(%arg0: i32) -> (i32, i32, i32) {
    %c0_i32 = arith.constant 0 : i32
    %c0_i32_0 = arith.constant 0 : i32
    %c0_i32_1 = arith.constant 0 : i32
    return %arg0, %c0_i32, %c0_i32_0 : i32, i32, i32
  }
}

</mosaic_0001>

<llo_original>
// kernel: tpu_custom_call.1
$region0: #{tpu_custom_call.1}
  #allocation0 [shape = 'u32[]', space=smem, size = 0x4, offset = 0x4, fixed_abs, tag = 'smem constant byte address 0x4 - core index']
  #allocation1 [shape = 'u32[144,128]{1,0:T(1,128)}', space=vmem, size = 0x12000, scoped, tag = 'internal scratch']
  #allocation2 [shape = 'f32[72,16]{1,0:T(8,128)}', space=vmem, size = 0x9000, scoped, tag = 'scratch operand']
  %s0 = inlined_call_operand.hbm [shape: f32[2,8,16], index: 0, kind: input, shape index: {}]
  %s1 = inlined_call_operand.vmem [shape: f32[8,72], index: 1, kind: input, shape index: {}]
  %s2 = inlined_call_operand.vmem [shape: f32[8,1], index: 2, kind: input, shape index: {}]
  %s3 = inlined_call_operand.hbm [shape: f32[2,4,16], index: 3, kind: output, shape index: {}]
  %s4 = sld [smem:[#allocation0]]
  $region49: #{tpu_custom_call.1} parent=0
    _
  %s6 = ssub.s32 1, %s4
  %s7 = scalar_select 0, %s6, %s4
  $region1: #{tpu_custom_call.1} parent=0
    #allocation3 [shape = 'u8[8192]{0}', space=vmem, size = 0x2000, scoped, tag = 'input window, operand 0']
    #allocation4 [shape = 's32[2]{0}', space=sflag, size = 0x8, scoped, tag = 'scoped memory for tpu_custom_call.1']
    #allocation5 [shape = 's32[2]{0}', space=sflag, size = 0x8, scoped, tag = 'scoped memory for tpu_custom_call.1']
    #allocation6 [shape = 'u8[4096]{0}', space=vmem, size = 0x1000, scoped, tag = 'output window, operand 0']
    %8 = vsyncpa [#allocation4], 0
    %s9 = scalar_lea.sflag [#allocation4], 1
    %10 = vsyncpa %s9, 0
    %11 = vsyncpa [#allocation5], 0
    %s12 = scalar_lea.sflag [#allocation5], 1
    %13 = vsyncpa %s12, 0
    loop: start=0, step=1, limit=4
    $region2: #{tpu_custom_call.1} parent=1 // loop_pre_header
      _
    $region3: #{tpu_custom_call.1} parent=1 // loop_header
      %s15 = sphi 0, %s19
      %p16 = scmp.ge.s32.totalorder %s15, 4
      %s25 = sphi 0, %s27
      %s28 = sphi 0, %s25
      %s29 = sphi 0, %s28
      %s45 = sphi 0, %s29
      %s49 = sphi 0, %s49
      %s51 = sphi 0, %s49
      %s52 = sphi 0, %s51
      %s66 = sphi 0, %s52
      %s70 = sphi 0, %s70
      %s72 = sphi 0, %s70
      %s73 = sphi 0, %s72
      %s87 = sphi 0, %s73
      %s93 = sphi 0, %s95
      %s96 = sphi 0, %s93
      %s97 = sphi 0, %s96
      %s113 = sphi 0, %s97
    $region4: #{tpu_custom_call.1} parent=1 // loop_header_branch
      %18 = sbr.rel (%p16) target = $region8
    $region5: #{tpu_custom_call.1} parent=1 // loop_body
      %s20 = ssub.s32 %s15, 1
      %s21 = ssub.s32 %s15, 2
      %s22 = sadd.s32 %s15, 1
      %s23 = ssub.s32 %s15, %s22
      %p24 = scmp.eq.s32.totalorder %s23, 0
      %s26 = sadd.s32 %s25, 1
      %s27 = scalar_select %p24, %s25, %s26
      %p30 = pneg %p24
      %p31 = scmp.eq.s32.totalorder %s15, 1
      %p32 = por %p30, %p31
      %p33 = scmp.ne.s32.totalorder %s25, %s28
      %p34 = scmp.eq.s32.totalorder %s15, 0
      %p35 = por %p33, %p34
      %p36 = scmp.ne.s32.totalorder %s25, %s28
      %p37 = scmp.eq.s32.totalorder %s20, 1
      %p38 = por %p36, %p37
      %p39 = scmp.ne.s32.totalorder %s28, %s29
      %p40 = scmp.eq.s32.totalorder %s20, 0
      %p41 = por %p39, %p40
      %p42 = scmp.ne.s32.totalorder %s28, %s29
      %p43 = scmp.eq.s32.totalorder %s21, 1
      %p44 = por %p42, %p43
      %p46 = scmp.ne.s32.totalorder %s29, %s45
      %p47 = scmp.eq.s32.totalorder %s21, 0
      %p48 = por %p46, %p47
      %s50 = sadd.s32 %s49, 1
      %p53 = scmp.eq.s32.totalorder %s15, 1
      %p54 = scmp.ne.s32.totalorder %s49, %s51
      %p55 = scmp.eq.s32.totalorder %s15, 0
      %p56 = por %p54, %p55
      %p57 = scmp.ne.s32.totalorder %s49, %s51
      %p58 = scmp.eq.s32.totalorder %s20, 1
      %p59 = por %p57, %p58
      %p60 = scmp.ne.s32.totalorder %s51, %s52
      %p61 = scmp.eq.s32.totalorder %s20, 0
      %p62 = por %p60, %p61
      %p63 = scmp.ne.s32.totalorder %s51, %s52
      %p64 = scmp.eq.s32.totalorder %s21, 1
      %p65 = por %p63, %p64
      %p67 = scmp.ne.s32.totalorder %s52, %s66
      %p68 = scmp.eq.s32.totalorder %s21, 0
      %p69 = por %p67, %p68
      %s71 = sadd.s32 %s70, 1
      %p74 = scmp.eq.s32.totalorder %s15, 1
      %p75 = scmp.ne.s32.totalorder %s70, %s72
      %p76 = scmp.eq.s32.totalorder %s15, 0
      %p77 = por %p75, %p76
      %p78 = scmp.ne.s32.totalorder %s70, %s72
      %p79 = scmp.eq.s32.totalorder %s20, 1
      %p80 = por %p78, %p79
      %p81 = scmp.ne.s32.totalorder %s72, %s73
      %p82 = scmp.eq.s32.totalorder %s20, 0
      %p83 = por %p81, %p82
      %p84 = scmp.ne.s32.totalorder %s72, %s73
      %p85 = scmp.eq.s32.totalorder %s21, 1
      %p86 = por %p84, %p85
      %p88 = scmp.ne.s32.totalorder %s73, %s87
      %p89 = scmp.eq.s32.totalorder %s21, 0
      %p90 = por %p88, %p89
      %s91 = ssub.s32 %s15, %s22
      %p92 = scmp.eq.s32.totalorder %s91, 0
      %s94 = sadd.s32 %s93, 1
      %s95 = scalar_select %p92, %s93, %s94
      %p98 = pneg %p92
      %p99 = scmp.eq.s32.totalorder %s15, 1
      %p100 = por %p98, %p99
      %p101 = scmp.ne.s32.totalorder %s93, %s96
      %p102 = scmp.eq.s32.totalorder %s15, 0
      %p103 = por %p101, %p102
      %p104 = scmp.ne.s32.totalorder %s93, %s96
      %p105 = scmp.eq.s32.totalorder %s20, 1
      %p106 = por %p104, %p105
      %p107 = scmp.ne.s32.totalorder %s96, %s97
      %p108 = scmp.eq.s32.totalorder %s20, 0
      %p109 = por %p107, %p108
      %p110 = scmp.ne.s32.totalorder %s96, %s97
      %p111 = scmp.eq.s32.totalorder %s21, 1
      %p112 = por %p110, %p111
      %p114 = scmp.ne.s32.totalorder %s97, %s113
      %p115 = scmp.eq.s32.totalorder %s21, 0
      %p116 = por %p114, %p115
      %p117 = scmp.le.s32.totalorder 1, %s15
      %p118 = scmp.lt.s32.totalorder %s15, 3
      %p119 = pnand %p117, %p118
      %p120 = pneg %p119
      // Predicated region
      $region9: #{tpu_custom_call.1} parent=5 // pred_check
        _
      $region10: #{tpu_custom_call.1} parent=5 // pred_check_branch
        %122 = sbr.rel (%p119) target = $region12
      $region11: #{tpu_custom_call.1} parent=5 // pred_region
        %s123 = ssub.s32 %s15, 1
        // Predicated region
        $region13: #{tpu_custom_call.1} parent=11 // pred_check
          %p124 = pneg %p62
        $region14: #{tpu_custom_call.1} parent=11 // pred_check_branch
          %126 = sbr.rel (%p124) target = $region16
        $region15: #{tpu_custom_call.1} parent=11 // pred_region
          _
        $region16: #{tpu_custom_call.1} parent=11 // pred_fallthru
          _
        // Predicated region
        $region17: #{tpu_custom_call.1} parent=11 // pred_check
          %p127 = pneg %p83
        $region18: #{tpu_custom_call.1} parent=11 // pred_check_branch
          %129 = sbr.rel (%p127) target = $region20
        $region19: #{tpu_custom_call.1} parent=11 // pred_region
          _
        $region20: #{tpu_custom_call.1} parent=11 // pred_fallthru
          _
      $region12: #{tpu_custom_call.1} parent=5 // pred_fallthru
        _
      %p130 = scmp.lt.s32.totalorder %s15, 2
      // Predicated region
      $region21: #{tpu_custom_call.1} parent=5 // pred_check
        %p131 = pneg %p130
      $region22: #{tpu_custom_call.1} parent=5 // pred_check_branch
        %133 = sbr.rel (%p131) target = $region24
      $region23: #{tpu_custom_call.1} parent=5 // pred_region
        // Predicated region
        $region25: #{tpu_custom_call.1} parent=23 // pred_check
          %p134 = pneg %p35
        $region26: #{tpu_custom_call.1} parent=23 // pred_check_branch
          %136 = sbr.rel (%p134) target = $region28
        $region27: #{tpu_custom_call.1} parent=23 // pred_region
          %s137 = sand.u32 %s25, 1
          %s138 = scalar_lea.sflag [#allocation4], %s137
          %s139 = sand.u32 %s25, 1
          %s140 = smul.addr %s139, 8
          %s141 = scalar_lea.vmem [#allocation3], %s140
          %s143 = ssub.s32 128, 128
          %144 = vsyncadd %s138, %s143
          %s145 = smul.addr %s15, 128
          %s146 = scalar_lea.hbm %s0, %s145
          %s148 = sshll.u32 %s141, 4
          %s149 = int_to_ptr.vmem [resolvable:$true] %s148
          %151 = dma.hbm_to_vmem [thread:$0]  %s146, 128, %s149, %s138
        $region28: #{tpu_custom_call.1} parent=23 // pred_fallthru
          _
      $region24: #{tpu_custom_call.1} parent=5 // pred_fallthru
        _
      %p152 = scmp.le.s32.totalorder 1, %s15
      %p153 = scmp.lt.s32.totalorder %s15, 3
      %p154 = pnand %p152, %p153
      %p155 = pneg %p154
      // Predicated region
      $region29: #{tpu_custom_call.1} parent=5 // pred_check
        _
      $region30: #{tpu_custom_call.1} parent=5 // pred_check_branch
        %157 = sbr.rel (%p154) target = $region32
      $region31: #{tpu_custom_call.1} parent=5 // pred_region
        %s158 = ssub.s32 %s15, 1
        %s159 = sand.u32 %s28, 1
        %s160 = scalar_lea.sflag [#allocation4], %s159
        %s161 = sand.u32 %s28, 1
        %s162 = smul.addr %s161, 8
        %s163 = scalar_lea.vmem [#allocation3], %s162
        // Predicated region
        $region33: #{tpu_custom_call.1} parent=31 // pred_check
          %p164 = pneg %p41
        $region34: #{tpu_custom_call.1} parent=31 // pred_check_branch
          %166 = sbr.rel (%p164) target = $region36
        $region35: #{tpu_custom_call.1} parent=31 // pred_region
          %167 = dma.done %s160, 128
        $region36: #{tpu_custom_call.1} parent=31 // pred_fallthru
          _
        %s168 = sand.u32 %s28, 1
        %s169 = scalar_lea.sflag [#allocation4], %s168
        %s170 = sand.u32 %s28, 1
        %s171 = smul.addr %s170, 8
        %s172 = scalar_lea.vmem [#allocation3], %s171
        %p173 = pneg %p41
        %p174 = pneg %p38
        %p175 = pneg %p62
        %p176 = pneg %p59
        %p177 = pneg %p83
        %p178 = pneg %p80
        %p179 = pneg %p109
        %p180 = pneg %p106
        %s181 = sand.u32 %s96, 1
        %s182 = scalar_lea.sflag [#allocation5], %s181
        %s183 = sand.u32 %s96, 1
        %s184 = smul.addr %s183, 4
        %s185 = scalar_lea.vmem [#allocation6], %s184
        %v186 = vld [vmem:[%s163] sm:$0xff]
        %188 = vrot.lane.b32.xlu0 %v186, 116
        %v189 = vpop.permute.xlu0 %188
        %vm191 = vcmask 31744
        %192 = vst.msk [vmem:[#allocation2] sm:$0xff] %vm191, %v189
        %v193 = vld [vmem:[%s163] sm:$0xff]
        %195 = vrot.lane.b32.xlu0 %v193, 4
        %v196 = vpop.permute.xlu0 %195
        %vm198 = vcmask 130080
        %199 = vst.msk [vmem:[#allocation2] sm:$0xff] %vm198, %v196
        %v200 = vld [vmem:[%s163] sm:$0xff]
        %202 = vrot.lane.b32.xlu0 %v200, 115
        %v203 = vpop.permute.xlu0 %202
        %vm205 = vcmask 23552
        %206 = vst.msk [vmem:[#allocation2 + $0x8] sm:$0xff] %vm205, %v203
        %v207 = vld [vmem:[%s163] sm:$0xff]
        %209 = vrot.lane.b32.xlu0 %v207, 3
        %v210 = vpop.permute.xlu0 %209
        %vm212 = vcmask 130072
        %213 = vst.msk [vmem:[#allocation2 + $0x8] sm:$0xff] %vm212, %v210
        %v214 = vld [vmem:[%s163] sm:$0xff]
        %216 = vrot.lane.b32.xlu0 %v214, 114
        %v217 = vpop.permute.xlu0 %216
        %vm219 = vcmask 15360
        %220 = vst.msk [vmem:[#allocation2 + $0x10] sm:$0xff] %vm219, %v217
        %v221 = vld [vmem:[%s163] sm:$0xff]
        %223 = vrot.lane.b32.xlu0 %v221, 2
        %v224 = vpop.permute.xlu0 %223
        %vm226 = vcmask 130064
        %227 = vst.msk [vmem:[#allocation2 + $0x10] sm:$0xff] %vm226, %v224
        %v228 = vld [vmem:[%s163] sm:$0xff]
        %230 = vrot.lane.b32.xlu0 %v228, 113
        %v231 = vpop.permute.xlu0 %230
        %vm233 = vcmask 7168
        %234 = vst.msk [vmem:[#allocation2 + $0x18] sm:$0xff] %vm233, %v231
        %v235 = vld [vmem:[%s163] sm:$0xff]
        %237 = vrot.lane.b32.xlu0 %v235, 1
        %v238 = vpop.permute.xlu0 %237
        %vm240 = vcmask 130056
        %241 = vst.msk [vmem:[#allocation2 + $0x18] sm:$0xff] %vm240, %v238
        %v242 = vld [vmem:[%s163] sm:$0xff]
        %vm243 = vcmask 130048
        %244 = vst.msk [vmem:[#allocation2 + $0x20] sm:$0xff] %vm243, %v242
        %v245 = vld [vmem:[%s163] sm:$0xff]
        %247 = vrot.lane.b32.xlu0 %v245, 127
        %v248 = vpop.permute.xlu0 %247
        %vm250 = vcmask 121856
        %251 = vst.msk [vmem:[#allocation2 + $0x28] sm:$0xff] %vm250, %v248
        %v252 = vld [vmem:[%s163] sm:$0xff]
        %254 = vrot.lane.b32.xlu0 %v252, 15
        %v255 = vpop.permute.xlu0 %254
        %vm257 = vcmask 130168
        %258 = vst.msk [vmem:[#allocation2 + $0x28] sm:$0xff] %vm257, %v255
        %v259 = vld [vmem:[%s163] sm:$0xff]
        %261 = vrot.lane.b32.xlu0 %v259, 126
        %v262 = vpop.permute.xlu0 %261
        %vm264 = vcmask 113664
        %265 = vst.msk [vmem:[#allocation2 + $0x30] sm:$0xff] %vm264, %v262
        %v266 = vld [vmem:[%s163] sm:$0xff]
        %268 = vrot.lane.b32.xlu0 %v266, 14
        %v269 = vpop.permute.xlu0 %268
        %vm271 = vcmask 130160
        %272 = vst.msk [vmem:[#allocation2 + $0x30] sm:$0xff] %vm271, %v269
        %v273 = vld [vmem:[%s163] sm:$0xff]
        %275 = vrot.lane.b32.xlu0 %v273, 125
        %v276 = vpop.permute.xlu0 %275
        %vm278 = vcmask 105472
        %279 = vst.msk [vmem:[#allocation2 + $0x38] sm:$0xff] %vm278, %v276
        %v280 = vld [vmem:[%s163] sm:$0xff]
        %282 = vrot.lane.b32.xlu0 %v280, 13
        %v283 = vpop.permute.xlu0 %282
        %vm285 = vcmask 130152
        %286 = vst.msk [vmem:[#allocation2 + $0x38] sm:$0xff] %vm285, %v283
        %v287 = vld [vmem:[%s163] sm:$0xff]
        %289 = vrot.lane.b32.xlu0 %v287, 124
        %v290 = vpop.permute.xlu0 %289
        %vm292 = vcmask 97280
        %293 = vst.msk [vmem:[#allocation2 + $0x40] sm:$0xff] %vm292, %v290
        %v294 = vld [vmem:[%s163] sm:$0xff]
        %296 = vrot.lane.b32.xlu0 %v294, 12
        %v297 = vpop.permute.xlu0 %296
        %vm299 = vcmask 130144
        %300 = vst.msk [vmem:[#allocation2 + $0x40] sm:$0xff] %vm299, %v297
        %v301 = vld [vmem:[%s1] sm:$0xff]
        %v302 = vld [vmem:[#allocation2] sm:$0xff]
        %v303 = vld [vmem:[#allocation2 + $0x8] sm:$0xff]
        %v304 = vld [vmem:[#allocation2 + $0x10] sm:$0xff]
        %v305 = vld [vmem:[#allocation2 + $0x18] sm:$0xff]
        %v306 = vld [vmem:[#allocation2 + $0x20] sm:$0xff]
        %v307 = vld [vmem:[#allocation2 + $0x28] sm:$0xff]
        %v308 = vld [vmem:[#allocation2 + $0x30] sm:$0xff]
        %v309 = vld [vmem:[#allocation2 + $0x38] sm:$0xff]
        %v310 = vld [vmem:[#allocation2 + $0x40] sm:$0xff]
        %v311 = vld [vmem:[%s2] sm:$0xff]
        %313 = vset.pattern.permute.xlu0 0
        %314 = vperm.xlu0 %313, %v311
        %v315 = vpop.permute.xlu0 %314
        %vm317 = vcmask 588800
        %v319 = vsel %vm317, %v301, 0
        %321 = vmatprep.subr.mxu0 0.0
        %322 = vmatpush1.msra.mxu0 %v302
        %323 = vmatprep.subr.mxu0 0.0
        %324 = vmatpush1.msra.mxu0 %v303
        %325 = vmatprep.subr.mxu0 0.0
        %326 = vmatpush1.msra.mxu0 %v304
        %327 = vmatprep.subr.mxu0 0.0
        %328 = vmatpush1.msra.mxu0 %v305
        %329 = vmatprep.subr.mxu0 0.0
        %330 = vmatpush1.msra.mxu0 %v306
        %331 = vmatprep.subr.mxu0 0.0
        %332 = vmatpush1.msra.mxu0 %v307
        %333 = vmatprep.subr.mxu0 0.0
        %334 = vmatpush1.msra.mxu0 %v308
        %335 = vmatprep.subr.mxu0 0.0
        %336 = vmatpush1.msra.mxu0 %v309
        %337 = vmatprep.subr.mxu0 0.0
        %338 = vmatpush1.msra.mxu0 %v310
        %339 = vmatprep.subr.mxu0 0.0
        %340 = vmatpush1.msra.mxu0 0.0
        %341 = vmatprep.subr.mxu0 0.0
        %342 = vmatpush1.msra.mxu0 0.0
        %343 = vmatprep.subr.mxu0 0.0
        %344 = vmatpush1.msra.mxu0 0.0
        %345 = vmatprep.subr.mxu0 0.0
        %346 = vmatpush1.msra.mxu0 0.0
        %347 = vmatprep.subr.mxu0 0.0
        %348 = vmatpush1.msra.mxu0 0.0
        %349 = vmatprep.subr.mxu0 0.0
        %350 = vmatpush1.msra.mxu0 0.0
        %351 = vmatprep.subr.mxu0 0.0
        %352 = vmatpush1.msra.mxu0 0.0
        %353 = vmatprep.subr.mxu0 0.0
        %354 = vmatpush1.msra.mxu0 0.0
        %355 = vmatprep.subr.mxu0 0.0
        %356 = vmatpush1.msra.mxu0 0.0
        %357 = vmatprep.subr.mxu0 0.0
        %358 = vmatpush1.msra.mxu0 0.0
        %359 = vmatprep.subr.mxu0 0.0
        %360 = vmatpush1.msra.mxu0 0.0
        %361 = vmatprep.subr.mxu0 0.0
        %362 = vmatpush1.msra.mxu0 0.0
        %363 = vmatprep.subr.mxu0 0.0
        %364 = vmatpush1.msra.mxu0 0.0
        %365 = vmatprep.subr.mxu0 0.0
        %366 = vmatpush1.msra.mxu0 0.0
        %367 = vmatprep.subr.mxu0 0.0
        %368 = vmatpush1.msra.mxu0 0.0
        %369 = vmatprep.subr.mxu0 0.0
        %370 = vmatpush1.msra.mxu0 0.0
        %371 = vmatprep.subr.mxu0 0.0
        %372 = vmatpush1.msra.mxu0 0.0
        %373 = vmatprep.subr.mxu0 0.0
        %374 = vmatpush1.msra.mxu0 0.0
        %375 = vmatprep.subr.mxu0 0.0
        %376 = vmatpush1.msra.mxu0 0.0
        %377 = vmatprep.subr.mxu0 0.0
        %378 = vmatpush1.msra.mxu0 0.0
        %379 = vmatprep.subr.mxu0 0.0
        %380 = vmatpush1.msra.mxu0 0.0
        %381 = vmatprep.subr.mxu0 0.0
        %382 = vmatpush1.msra.mxu0 0.0
        %383 = vmatprep.subr.mxu0 0.0
        %384 = vmatpush1.msra.mxu0 0.0
        %385 = vmatprep.mubr.f32.mxu0 0.0
        %386 = vmatmul.mubr.f32.gmra.mrb[0].mxu0 %v319
        %v387 = vpop.f32.mrb[0].mxu0
        %v388 = vadd.f32 %v315, %v387
        %v389 = vpop.f32.mrb[0].mxu0
        %390 = vdwg.mxu0
        %vm391 = vcmask 125952
        %392 = vst.msk [vmem:[%s185] sm:$0xf] %vm391, %v388
        %s393 = sand.u32 %s96, 1
        %s394 = scalar_lea.sflag [#allocation5], %s393
        %s395 = sand.u32 %s96, 1
        %s396 = smul.addr %s395, 4
        %s397 = scalar_lea.vmem [#allocation6], %s396
        // Predicated region
        $region37: #{tpu_custom_call.1} parent=31 // pred_check
          %p398 = pneg %p106
        $region38: #{tpu_custom_call.1} parent=31 // pred_check_branch
          %400 = sbr.rel (%p398) target = $region40
        $region39: #{tpu_custom_call.1} parent=31 // pred_region
          %s402 = ssub.s32 64, 64
          %403 = vsyncadd %s394, %s402
          %s404 = smul.addr %s20, 64
          %s405 = scalar_lea.hbm %s3, %s404
          %s407 = sshll.u32 %s397, 4
          %s408 = int_to_ptr.vmem [resolvable:$true] %s407
          %410 = dma.vmem_to_hbm [thread:$0]  %s408, 64, %s405, %s394
        $region40: #{tpu_custom_call.1} parent=31 // pred_fallthru
          _
      $region32: #{tpu_custom_call.1} parent=5 // pred_fallthru
        _
      %p411 = scmp.le.s32.totalorder 2, %s15
      // Predicated region
      $region41: #{tpu_custom_call.1} parent=5 // pred_check
        %p412 = pneg %p411
      $region42: #{tpu_custom_call.1} parent=5 // pred_check_branch
        %414 = sbr.rel (%p412) target = $region44
      $region43: #{tpu_custom_call.1} parent=5 // pred_region
        %s415 = ssub.s32 %s15, 2
        // Predicated region
        $region45: #{tpu_custom_call.1} parent=43 // pred_check
          %p416 = pneg %p112
        $region46: #{tpu_custom_call.1} parent=43 // pred_check_branch
          %418 = sbr.rel (%p416) target = $region48
        $region47: #{tpu_custom_call.1} parent=43 // pred_region
          %s419 = sand.u32 %s97, 1
          %s420 = scalar_lea.sflag [#allocation5], %s419
          %s421 = sand.u32 %s97, 1
          %s422 = smul.addr %s421, 4
          %s423 = scalar_lea.vmem [#allocation6], %s422
          %424 = dma.done %s420, 64
        $region48: #{tpu_custom_call.1} parent=43 // pred_fallthru
          _
      $region44: #{tpu_custom_call.1} parent=5 // pred_fallthru
        _
    $region6: #{tpu_custom_call.1} parent=1 // loop_footer
      %s19 = sadd.s32 1, %s15
    $region7: #{tpu_custom_call.1} parent=1 // loop_footer_branch
      %14 = sbr.rel target = $region3
    $region8: #{tpu_custom_call.1} parent=1 // loop_exit
      _
    %425 = vsyncpa [#allocation4], 1
    %s426 = scalar_lea.sflag [#allocation4], 1
    %427 = vsyncpa %s426, 1
    %428 = vsyncpa [#allocation5], 1
    %s429 = scalar_lea.sflag [#allocation5], 1
    %430 = vsyncpa %s429, 1

</llo_original>
